<compile_context>
chip_gen: v7x
topology: tpu7x:2x2x1
jax: 0.10.0
libtpu: 0.0.40
codegen_flags: <defaults>
</compile_context>

<pallas_src>
import functools

import jax
import jax.numpy as jnp
from jax import lax
from jax.experimental import pallas as pl
from jax.experimental.pallas import tpu as pltpu

_IGNORE_INDEX = -100  # PyTorch F.cross_entropy default


def _ce_loss_kernel(logits_ref, target_ref, loss_ref, m_ref, l_ref, t_ref,
                    *, c_total, tile_c):
    j = pl.program_id(1)
    last_j = pl.num_programs(1) - 1

    @pl.when(j == 0)
    def _init():
        m_ref[...] = jnp.full_like(m_ref, -jnp.inf)
        l_ref[...] = jnp.zeros_like(l_ref)
        t_ref[...] = jnp.zeros_like(t_ref)

    x = logits_ref[...].astype(jnp.float32)           # (tile_n, tile_c), widen in-vreg
    tgt = target_ref[...]                             # (tile_n, 1) int32
    tile_n = x.shape[0]

    # Global class ids covered by this C tile.
    col = j * tile_c + lax.broadcasted_iota(jnp.int32, (tile_n, tile_c), 1)
    if c_total % tile_c != 0:
        # Mask padded classes of the (possibly partial) last C tile.
        x = jnp.where(col < c_total, x, -jnp.inf)

    # --- single fused pass over the tile: online logsumexp + target gather ---
    m_old = m_ref[...]
    m_new = jnp.maximum(m_old, jnp.max(x, axis=-1, keepdims=True))
    alpha = jnp.exp(m_old - m_new)
    l_ref[...] = alpha * l_ref[...] + jnp.sum(jnp.exp(x - m_new),
                                              axis=-1, keepdims=True)
    t_ref[...] += jnp.sum(jnp.where(col == tgt, x, 0.0),
                          axis=-1, keepdims=True)
    m_ref[...] = m_new

    @pl.when(j == last_j)
    def _finalize():
        lse = m_ref[...] + jnp.log(l_ref[...])
        per_example = lse - t_ref[...]                 # lse - logit[target]
        # Rows with ignore_index contribute 0 (excluded from the mean by the
        # wrapper's valid-target count).
        per_example = jnp.where(tgt != _IGNORE_INDEX, per_example, 0.0)
        loss_ref[...] = per_example


def ce_loss(logits, target):
    """Equivalent of F.cross_entropy(logits, target) (mean, ignore_index=-100).

    logits: (N, C) float array (any float dtype; NOT pre-cast -> less HBM traffic)
    target: (N,)   int class indices (may contain -100 = ignore)
    returns: scalar float32 mean loss
    """
    n, c = logits.shape
    target2d = target.astype(jnp.int32).reshape(n, 1)

    # Tile sizes: full dims when small (exempt from the (8,128) rule), otherwise
    # aligned tiles that fit comfortably in every generation's scoped VMEM.
    tile_n = n if n <= 256 else 256          # 256 % 8 == 0 (and % 16 for bf16)
    tile_c = c if c <= 4096 else 4096        # 4096 % 128 == 0
    grid = (pl.cdiv(n, tile_n), pl.cdiv(c, tile_c))

    kernel = functools.partial(_ce_loss_kernel, c_total=c, tile_c=tile_c)

    per_example = pl.pallas_call(
        kernel,
        out_shape=jax.ShapeDtypeStruct((n, 1), jnp.float32),
        grid_spec=pltpu.PrefetchScalarGridSpec(
            num_scalar_prefetch=0,
            grid=grid,
            in_specs=[
                pl.BlockSpec((tile_n, tile_c), lambda i, j: (i, j)),
                pl.BlockSpec((tile_n, 1), lambda i, j: (i, 0)),
            ],
            out_specs=pl.BlockSpec((tile_n, 1), lambda i, j: (i, 0)),
            scratch_shapes=[
                pltpu.VMEM((tile_n, 1), jnp.float32),   # running max m
                pltpu.VMEM((tile_n, 1), jnp.float32),   # running exp-sum l
                pltpu.VMEM((tile_n, 1), jnp.float32),   # target logit
            ],
        ),
        compiler_params=pltpu.CompilerParams(
            dimension_semantics=("parallel", "arbitrary")),
    )(logits, target2d)

    # Mean over non-ignored targets, divided by the GLOBAL valid count.
    num_valid = jnp.sum((target != _IGNORE_INDEX).astype(jnp.float32))
    return jnp.sum(per_example[:, 0]) / num_valid


if __name__ == "__main__":
    key = jax.random.PRNGKey(0)
    k_logits, k_target = jax.random.split(key)

    N, C = 8, 32  # small batch of 8 examples, 32 classes
    logits = jax.random.normal(k_logits, (N, C), dtype=jnp.float32)
    target = jax.random.randint(k_target, (N,), 0, C, dtype=jnp.int32)

    loss = ce_loss(logits, target)
    jax.block_until_ready(loss)

    # Cross-check against a pure-JAX reference (silent).
    log_probs = jax.nn.log_softmax(logits, axis=-1)
    ref = -jnp.mean(jnp.take_along_axis(log_probs, target[:, None], axis=-1)[:, 0])
    assert jnp.allclose(loss, ref, atol=1e-5, rtol=1e-5), (loss, ref)

    # ignore_index=-100 behaviour (PyTorch default) — silent cross-check.
    target_ig = target.at[0].set(-100)
    loss_ig = ce_loss(logits, target_ig)
    jax.block_until_ready(loss_ig)
    valid = target_ig != _IGNORE_INDEX
    safe_t = jnp.where(valid, target_ig, 0)
    losses = -jnp.take_along_axis(log_probs, safe_t[:, None], axis=-1)[:, 0]
    ref_ig = jnp.sum(jnp.where(valid, losses, 0.0)) / jnp.sum(valid.astype(jnp.float32))
    assert jnp.allclose(loss_ig, ref_ig, atol=1e-5, rtol=1e-5), (loss_ig, ref_ig)

    print("KERNEL_OK")
</pallas_src>

<mosaic_0001>
module attributes {stable_mosaic.version = 11 : i64} {
  func.func @_ce_loss_kernel(%arg0: i32, %arg1: i32, %arg2: memref<8x32xf32, #tpu.memory_space<vmem>>, %arg3: memref<8x1xi32, #tpu.memory_space<vmem>>, %arg4: memref<8x1xf32, #tpu.memory_space<vmem>>, %arg5: memref<8x1xf32, #tpu.memory_space<vmem>>, %arg6: memref<8x1xf32, #tpu.memory_space<vmem>>, %arg7: memref<8x1xf32, #tpu.memory_space<vmem>>) attributes {dimension_semantics = [#tpu.dimension_semantics<parallel>, #tpu.dimension_semantics<arbitrary>], iteration_bounds = array<i64: 1, 1>, scalar_prefetch = 0 : i64, scratch_operands = 3 : i64, tpu.core_type = #tpu.core_type<tc>, window_params = [{transform_indices = @transform_0, window_bounds = array<i64: 8, 32>}, {transform_indices = @transform_1, window_bounds = array<i64: 8, 1>}, {transform_indices = @transform_2, window_bounds = array<i64: 8, 1>}]} {
    %c0_i32 = arith.constant 0 : i32
    %0 = arith.cmpi eq, %arg1, %c0_i32 : i32
    %1 = arith.extui %0 : i1 to i32
    %c0_i32_0 = arith.constant 0 : i32
    %2 = arith.cmpi ne, %1, %c0_i32_0 : i32
    scf.if %2 {
      %cst_21 = arith.constant 0xFF800000 : f32
      %37 = vector.broadcast %cst_21 : f32 to vector<8x1xf32>
      %c0_22 = arith.constant 0 : index
      %c0_23 = arith.constant 0 : index
      %38 = vector.load %arg5[%c0_22, %c0_23] : memref<8x1xf32, #tpu.memory_space<vmem>>, vector<8x1xf32>
      tpu.vector_store %arg5[%c0_22, %c0_23], %37 {strides = array<i32>} : memref<8x1xf32, #tpu.memory_space<vmem>>, vector<8x1xf32>,
      %cst_24 = arith.constant 0.000000e+00 : f32
      %39 = vector.broadcast %cst_24 : f32 to vector<8x1xf32>
      %c0_25 = arith.constant 0 : index
      %c0_26 = arith.constant 0 : index
      %40 = vector.load %arg6[%c0_25, %c0_26] : memref<8x1xf32, #tpu.memory_space<vmem>>, vector<8x1xf32>
      tpu.vector_store %arg6[%c0_25, %c0_26], %39 {strides = array<i32>} : memref<8x1xf32, #tpu.memory_space<vmem>>, vector<8x1xf32>,
      %cst_27 = arith.constant 0.000000e+00 : f32
      %41 = vector.broadcast %cst_27 : f32 to vector<8x1xf32>
      %c0_28 = arith.constant 0 : index
      %c0_29 = arith.constant 0 : index
      %42 = vector.load %arg7[%c0_28, %c0_29] : memref<8x1xf32, #tpu.memory_space<vmem>>, vector<8x1xf32>
      tpu.vector_store %arg7[%c0_28, %c0_29], %41 {strides = array<i32>} : memref<8x1xf32, #tpu.memory_space<vmem>>, vector<8x1xf32>,
    } else {
    }
    %c0 = arith.constant 0 : index
    %c0_1 = arith.constant 0 : index
    %3 = vector.load %arg2[%c0, %c0_1] : memref<8x32xf32, #tpu.memory_space<vmem>>, vector<8x32xf32>
    %c0_2 = arith.constant 0 : index
    %c0_3 = arith.constant 0 : index
    %4 = vector.load %arg3[%c0_2, %c0_3] : memref<8x1xi32, #tpu.memory_space<vmem>>, vector<8x1xi32>
    %c32_i32 = arith.constant 32 : i32
    %5 = arith.muli %arg1, %c32_i32 : i32
    %6 = tpu.iota {dimensions = array<i32: 1>} : vector<8x32xi32>
    %7 = vector.broadcast %5 : i32 to vector<8x32xi32>
    %8 = arith.addi %7, %6 : vector<8x32xi32>
    %c0_4 = arith.constant 0 : index
    %c0_5 = arith.constant 0 : index
    %9 = vector.load %arg5[%c0_4, %c0_5] : memref<8x1xf32, #tpu.memory_space<vmem>>, vector<8x1xf32>
    %cst = arith.constant dense<0xFF800000> : vector<8xf32>
    %10 = vector.multi_reduction <maximumf>, %3, %cst [1] : vector<8x32xf32> to vector<8xf32>
    %11 = vector.shape_cast %10 : vector<8xf32> to vector<8x1xf32>
    %12 = arith.maximumf %9, %11 : vector<8x1xf32>
    %13 = arith.subf %9, %12 : vector<8x1xf32>
    %14 = math.exp %13 : vector<8x1xf32>
    %c0_6 = arith.constant 0 : index
    %c0_7 = arith.constant 0 : index
    %15 = vector.load %arg6[%c0_6, %c0_7] : memref<8x1xf32, #tpu.memory_space<vmem>>, vector<8x1xf32>
    %16 = arith.mulf %14, %15 : vector<8x1xf32>
    %17 = vector.broadcast %12 : vector<8x1xf32> to vector<8x32xf32>
    %18 = arith.subf %3, %17 : vector<8x32xf32>
    %19 = math.exp %18 : vector<8x32xf32>
    %cst_8 = arith.constant dense<0.000000e+00> : vector<8xf32>
    %20 = vector.multi_reduction <add>, %19, %cst_8 [1] : vector<8x32xf32> to vector<8xf32>
    %21 = vector.shape_cast %20 : vector<8xf32> to vector<8x1xf32>
    %22 = arith.addf %16, %21 : vector<8x1xf32>
    %c0_9 = arith.constant 0 : index
    %c0_10 = arith.constant 0 : index
    %23 = vector.load %arg6[%c0_9, %c0_10] : memref<8x1xf32, #tpu.memory_space<vmem>>, vector<8x1xf32>
    tpu.vector_store %arg6[%c0_9, %c0_10], %22 {strides = array<i32>} : memref<8x1xf32, #tpu.memory_space<vmem>>, vector<8x1xf32>,
    %c0_11 = arith.constant 0 : index
    %c0_12 = arith.constant 0 : index
    %24 = vector.load %arg7[%c0_11, %c0_12] : memref<8x1xf32, #tpu.memory_space<vmem>>, vector<8x1xf32>
    %25 = vector.broadcast %4 : vector<8x1xi32> to vector<8x32xi32>
    %26 = arith.cmpi eq, %8, %25 : vector<8x32xi32>
    %cst_13 = arith.constant 0.000000e+00 : f32
    %27 = vector.broadcast %cst_13 : f32 to vector<8x32xf32>
    %28 = arith.select %26, %3, %27 : vector<8x32xi1>, vector<8x32xf32>
    %cst_14 = arith.constant dense<0.000000e+00> : vector<8xf32>
    %29 = vector.multi_reduction <add>, %28, %cst_14 [1] : vector<8x32xf32> to vector<8xf32>
    %30 = vector.shape_cast %29 : vector<8xf32> to vector<8x1xf32>
    %31 = arith.addf %24, %30 : vector<8x1xf32>
    %c0_15 = arith.constant 0 : index
    %c0_16 = arith.constant 0 : index
    %32 = vector.load %arg7[%c0_15, %c0_16] : memref<8x1xf32, #tpu.memory_space<vmem>>, vector<8x1xf32>
    tpu.vector_store %arg7[%c0_15, %c0_16], %31 {strides = array<i32>} : memref<8x1xf32, #tpu.memory_space<vmem>>, vector<8x1xf32>,
    %c0_17 = arith.constant 0 : index
    %c0_18 = arith.constant 0 : index
    %33 = vector.load %arg5[%c0_17, %c0_18] : memref<8x1xf32, #tpu.memory_space<vmem>>, vector<8x1xf32>
    tpu.vector_store %arg5[%c0_17, %c0_18], %12 {strides = array<i32>} : memref<8x1xf32, #tpu.memory_space<vmem>>, vector<8x1xf32>,
    %c0_i32_19 = arith.constant 0 : i32
    %34 = arith.cmpi eq, %arg1, %c0_i32_19 : i32
    %35 = arith.extui %34 : i1 to i32
    %c0_i32_20 = arith.constant 0 : i32
    %36 = arith.cmpi ne, %35, %c0_i32_20 : i32
    scf.if %36 {
      %c0_21 = arith.constant 0 : index
      %c0_22 = arith.constant 0 : index
      %37 = vector.load %arg5[%c0_21, %c0_22] : memref<8x1xf32, #tpu.memory_space<vmem>>, vector<8x1xf32>
      %c0_23 = arith.constant 0 : index
      %c0_24 = arith.constant 0 : index
      %38 = vector.load %arg6[%c0_23, %c0_24] : memref<8x1xf32, #tpu.memory_space<vmem>>, vector<8x1xf32>
      %39 = math.log %38 : vector<8x1xf32>
      %40 = arith.addf %37, %39 : vector<8x1xf32>
      %c0_25 = arith.constant 0 : index
      %c0_26 = arith.constant 0 : index
      %41 = vector.load %arg7[%c0_25, %c0_26] : memref<8x1xf32, #tpu.memory_space<vmem>>, vector<8x1xf32>
      %42 = arith.subf %40, %41 : vector<8x1xf32>
      %c-100_i32 = arith.constant -100 : i32
      %43 = vector.broadcast %c-100_i32 : i32 to vector<8x1xi32>
      %44 = arith.cmpi ne, %4, %43 : vector<8x1xi32>
      %cst_27 = arith.constant 0.000000e+00 : f32
      %45 = vector.broadcast %cst_27 : f32 to vector<8x1xf32>
      %46 = arith.select %44, %42, %45 : vector<8x1xi1>, vector<8x1xf32>
      %c0_28 = arith.constant 0 : index
      %c0_29 = arith.constant 0 : index
      %47 = vector.load %arg4[%c0_28, %c0_29] : memref<8x1xf32, #tpu.memory_space<vmem>>, vector<8x1xf32>
      tpu.vector_store %arg4[%c0_28, %c0_29], %46 {strides = array<i32>} : memref<8x1xf32, #tpu.memory_space<vmem>>, vector<8x1xf32>,
    } else {
    }
    return
  }
  func.func @transform_0(%arg0: i32, %arg1: i32) -> (i32, i32) {
    %c0_i32 = arith.constant 0 : i32
    return %arg0, %arg1 : i32, i32
  }
  func.func @transform_1(%arg0: i32, %arg1: i32) -> (i32, i32) {
    %c0_i32 = arith.constant 0 : i32
    %c0_i32_0 = arith.constant 0 : i32
    return %arg0, %c0_i32 : i32, i32
  }
  func.func @transform_2(%arg0: i32, %arg1: i32) -> (i32, i32) {
    %c0_i32 = arith.constant 0 : i32
    %c0_i32_0 = arith.constant 0 : i32
    return %arg0, %c0_i32 : i32, i32
  }
}

</mosaic_0001>

<llo_original>
// kernel: tpu_custom_call.1
$region0: #{tpu_custom_call.1}
  #allocation0 [shape = 'u32[]', space=smem, size = 0x4, offset = 0x4, fixed_abs, tag = 'smem constant byte address 0x4 - core index']
  #allocation1 [shape = 'u32[144,128]{1,0:T(1,128)}', space=vmem, size = 0x12000, scoped, tag = 'internal scratch']
  #allocation2 [shape = 'f32[8,1]{1,0:T(8,128)}', space=vmem, size = 0x1000, scoped, tag = 'scratch operand']
  #allocation3 [shape = 'f32[8,1]{1,0:T(8,128)}', space=vmem, size = 0x1000, scoped, tag = 'scratch operand']
  #allocation4 [shape = 'f32[8,1]{1,0:T(8,128)}', space=vmem, size = 0x1000, scoped, tag = 'scratch operand']
  %s0 = inlined_call_operand.vmem [shape: f32[8,32], index: 0, kind: input, shape index: {}]
  %s1 = inlined_call_operand.vmem [shape: s32[8,1], index: 1, kind: input, shape index: {}]
  %s2 = inlined_call_operand.vmem [shape: f32[8,1], index: 2, kind: output, shape index: {}]
  %s3 = sld [smem:[#allocation0]]
  $region26: #{tpu_custom_call.1} parent=0
    _
  %s5 = ssub.s32 1, %s3
  %s6 = scalar_select 0, %s5, %s3
  // Predicated region
  $region2: #{tpu_custom_call.1} parent=0 // pred_check
    _
  $region3: #{tpu_custom_call.1} parent=0 // pred_check_branch
    %8 = sbr.rel (0) target = $region5
  $region4: #{tpu_custom_call.1} parent=0 // pred_region
    _
  $region5: #{tpu_custom_call.1} parent=0 // pred_fallthru
    _
  // Predicated region
  $region6: #{tpu_custom_call.1} parent=0 // pred_check
    _
  $region7: #{tpu_custom_call.1} parent=0 // pred_check_branch
    %10 = sbr.rel (0) target = $region9
  $region8: #{tpu_custom_call.1} parent=0 // pred_region
    _
  $region9: #{tpu_custom_call.1} parent=0 // pred_fallthru
    _
  %p11 = scmp.eq.s32.totalorder 0, 0
  // Predicated region
  $region10: #{tpu_custom_call.1} parent=0 // pred_check
    %p12 = pneg %p11
  $region11: #{tpu_custom_call.1} parent=0 // pred_check_branch
    %14 = sbr.rel (%p12) target = $region13
  $region12: #{tpu_custom_call.1} parent=0 // pred_region
    %vm15 = vcmask 7168
    %16 = vst.msk [vmem:[#allocation2] sm:$0xff] %vm15, -inf
    %17 = vst.msk [vmem:[#allocation3] sm:$0xff] %vm15, 0.0
    %18 = vst.msk [vmem:[#allocation4] sm:$0xff] %vm15, 0.0
  $region13: #{tpu_custom_call.1} parent=0 // pred_fallthru
    _
  %v19 = vld [vmem:[%s0] sm:$0xff]
  %v20 = vld [vmem:[%s1] sm:$0xff]
  %s21 = smul.u32 0, 32
  %v22 = vlaneseq
  %v23 = vand.u32 %v22, 127
  %v24 = vstv %s21
  %v25 = vadd.s32 %v24, %v23
  %v26 = vld [vmem:[#allocation2] sm:$0xff]
  %vm27 = vcmask 261120
  %v28 = vsel %vm27, %v19, -inf
  %29 = vmax.xlane.f32.xlu0 %v28
  %v30 = vpop.xlane.xlu0 %29
  %v31 = vmax.f32 %v26, %v30
  %v32 = vsub.f32 %v26, %v31
  %v33 = vmul.f32 %v32, 1.442695
  %v34 = vpow.pop %v33
  %v35 = vld [vmem:[#allocation3] sm:$0xff]
  %v36 = vmul.f32 %v34, %v35
  %38 = vset.pattern.permute.xlu0 0
  %39 = vperm.xlu0 %38, %v31
  %v40 = vpop.permute.xlu0 %39
  %v42 = vsub.f32 %v19, %v40
  %v43 = vmul.f32 %v42, 1.442695
  %v44 = vpow.pop %v43
  %v45 = vsel %vm27, %v44, 0.0
  %46 = vadd.xlane.f32.xlu0 %v45
  %v47 = vpop.xlane.xlu0 %46
  %v48 = vadd.f32 %v36, %v47
  %vm49 = vcmask 7168
  %50 = vst.msk [vmem:[#allocation3] sm:$0xff] %vm49, %v48
  %v51 = vld [vmem:[#allocation4] sm:$0xff]
  %52 = vset.pattern.permute.xlu0 0
  %53 = vperm.xlu0 %52, %v20
  %v54 = vpop.permute.xlu0 %53
  %vm55 = vcmp.eq.s32.totalorder %v25, %v54
  %v56 = vsel %vm55, %v19, 0.0
  %v57 = vsel %vm27, %v56, 0.0
  %58 = vadd.xlane.f32.xlu0 %v57
  %v59 = vpop.xlane.xlu0 %58
  %v60 = vadd.f32 %v51, %v59
  %61 = vst.msk [vmem:[#allocation4] sm:$0xff] %vm49, %v60
  %62 = vst.msk [vmem:[#allocation2] sm:$0xff] %vm49, %v31
  // Predicated region
  $region14: #{tpu_custom_call.1} parent=0 // pred_check
    %p63 = pneg %p11
  $region15: #{tpu_custom_call.1} parent=0 // pred_check_branch
    %65 = sbr.rel (%p63) target = $region17
  $region16: #{tpu_custom_call.1} parent=0 // pred_region
    %v66 = vld [vmem:[#allocation2] sm:$0xff]
    %v67 = vld [vmem:[#allocation3] sm:$0xff]
    %v68 = vlog2.pop %v67
    %v69 = vmul.f32 %v68, 0.6931472
    %v70 = vadd.f32 %v66, %v69
    %v71 = vld [vmem:[#allocation4] sm:$0xff]
    %v72 = vsub.f32 %v70, %v71
    %vm73 = vcmp.ne.s32.totalorder %v20, 4294967196
    %v74 = vsel %vm73, %v72, 0.0
    %75 = vst.msk [vmem:[%s2] sm:$0xff] %vm49, %v74
  $region17: #{tpu_custom_call.1} parent=0 // pred_fallthru
    _
  // Predicated region
  $region18: #{tpu_custom_call.1} parent=0 // pred_check
    _
  $region19: #{tpu_custom_call.1} parent=0 // pred_check_branch
    %77 = sbr.rel (0) target = $region21
  $region20: #{tpu_custom_call.1} parent=0 // pred_region
    _
  $region21: #{tpu_custom_call.1} parent=0 // pred_fallthru
    _
  // Predicated region
  $region22: #{tpu_custom_call.1} parent=0 // pred_check
    _
  $region23: #{tpu_custom_call.1} parent=0 // pred_check_branch
    %79 = sbr.rel (0) target = $region25
  $region24: #{tpu_custom_call.1} parent=0 // pred_region
    _
  $region25: #{tpu_custom_call.1} parent=0 // pred_fallthru
    _

</llo_original>
